<compile_context>
chip_gen: v6e
topology: v6e:2x2x1
jax: 0.10.0
libtpu: 0.0.40
codegen_flags: <defaults>
</compile_context>

<pallas_src>
import functools

import jax
import jax.numpy as jnp
from jax.experimental import pallas as pl
from jax.experimental.pallas import tpu as pltpu

_LANE = 128
_BLOCK_BUDGET_BYTES = 6 * 1024 * 1024    # per-input, per-block DMA slab
_VMEM_LIMIT_BYTES = 48 * 1024 * 1024     # > v5e 16 MiB scoped default, < v7x 64 MiB physical


def _l1_loss_kernel(gt_ref, g_ref, o_ref, acc_ref, *, inv_d, d_total, tk):
    """Grid = (batch tiles [parallel], feature chunks [arbitrary]).

    Accumulates per-row |diff| sums (lane-major, f32) across feature chunks in
    `acc_ref`; writes the per-row mean on the last chunk.
    """
    k = pl.program_id(1)

    @pl.when(k == 0)
    def _init():
        acc_ref[...] = jnp.zeros_like(acc_ref)

    # Subtract/abs in the native input dtype (bf16 stays bf16 on v6e/v7x VALUs).
    absdiff = jnp.abs(gt_ref[...] - g_ref[...])
    if absdiff.dtype not in (jnp.dtype(jnp.float32), jnp.dtype(jnp.bfloat16)):
        absdiff = absdiff.astype(jnp.float32)

    # Mask feature-dim padding of the ragged last chunk (only traced if needed;
    # never traced when tk == D).  Cheap VPU filler in a mem-bound kernel.
    if d_total % tk != 0:
        cols = k * tk + jax.lax.broadcasted_iota(jnp.int32, absdiff.shape, 1)
        absdiff = jnp.where(cols < d_total, absdiff, jnp.zeros_like(absdiff))

    # Row sums in lane-major (rows -> lanes) layout via an MXU mat-vec with a
    # ones vector: ones(8, tk) . absdiff(tb, tk)^T -> (8, tb), f32 accumulate,
    # HIGHEST precision so f32 inputs keep full f32 accuracy.  All 8 result
    # rows are identical; row 0 is used at finalize.  This avoids both a
    # sublane->lane relayout and masked one-lane column stores.
    ones = jnp.ones((8, absdiff.shape[1]), dtype=absdiff.dtype)
    row_sums = jax.lax.dot_general(
        ones, absdiff,
        dimension_numbers=(((1,), (1,)), ((), ())),
        precision=jax.lax.Precision.HIGHEST,
        preferred_element_type=jnp.float32,
    )                                     # (8, tb) f32
    acc_ref[...] += row_sums

    @pl.when(k == pl.num_programs(1) - 1)
    def _finalize():
        o_ref[...] = (acc_ref[pl.ds(0, 1), :] * inv_d).astype(o_ref.dtype)


def _choose_tiles(B, D, itemsize, budget):
    """Pick (tb, tk): batch tile (lane-granular when < B) and feature chunk."""
    total = B * D * itemsize

    # Small problem (or small batch whose full-D slab fits): a single block.
    if total <= min(1 << 20, budget) or (B < 2 * _LANE and total <= budget):
        return B, D

    if B >= 2 * _LANE:
        # Preferred: tile the batch at lane granularity (the lane-dense (1, tb)
        # output block needs tb % 128 == 0), full feature dim per block.
        if _LANE * D * itemsize <= budget:
            rows = min(budget // (D * itemsize), pl.cdiv(B, 2))  # >= 2 batch steps
            tb = max(_LANE, (rows // _LANE) * _LANE)
            return (B, D) if tb >= B else (tb, D)
        # Feature dim too long even for 128 rows: chunk features as well.
        tb = _LANE
        tk = max(_LANE, ((budget // (tb * itemsize)) // _LANE) * _LANE)
        return tb, min(tk, D)

    # Small batch (< 256 rows) with a long feature dim: keep the whole batch
    # per block and chunk the (reduction) feature dim.
    tk = max(_LANE, ((budget // (B * itemsize)) // _LANE) * _LANE)
    return B, min(tk, D)


def l1_loss(g_gt, g, train_batchsize=None, *, block_budget_bytes=_BLOCK_BUDGET_BYTES):
    """Pallas equivalent of L1Loss.forward: mean(|g_gt - g|, dim=1) -> (B,).

    `train_batchsize` is accepted (and ignored) to mirror the PyTorch signature.
    """
    del train_batchsize  # unused in the reference forward pass
    assert g_gt.shape == g.shape and g_gt.ndim == 2
    B, D = g_gt.shape

    out_dtype = jnp.result_type(g_gt.dtype, g.dtype)
    itemsize = max(jnp.dtype(g_gt.dtype).itemsize, jnp.dtype(g.dtype).itemsize)

    tb, tk = _choose_tiles(B, D, itemsize, block_budget_bytes)
    nb, nk = pl.cdiv(B, tb), pl.cdiv(D, tk)

    kernel = functools.partial(_l1_loss_kernel, inv_d=1.0 / D, d_total=D, tk=tk)

    bytes_accessed = (
        g_gt.size * jnp.dtype(g_gt.dtype).itemsize
        + g.size * jnp.dtype(g.dtype).itemsize
        + B * jnp.dtype(out_dtype).itemsize
    )

    out = pl.pallas_call(
        kernel,
        out_shape=jax.ShapeDtypeStruct((1, B), out_dtype),
        grid_spec=pltpu.PrefetchScalarGridSpec(
            num_scalar_prefetch=0,
            grid=(nb, nk),
            in_specs=[
                pl.BlockSpec((tb, tk), lambda i, k: (i, k)),
                pl.BlockSpec((tb, tk), lambda i, k: (i, k)),
            ],
            # Lane-dense output row; same block across the reduction axis.
            out_specs=pl.BlockSpec((1, tb), lambda i, k: (0, i)),
            scratch_shapes=[pltpu.VMEM((8, tb), jnp.float32)],
        ),
        compiler_params=pltpu.CompilerParams(
            dimension_semantics=("parallel", "arbitrary"),
            vmem_limit_bytes=_VMEM_LIMIT_BYTES,
        ),
        cost_estimate=pl.CostEstimate(
            flops=18 * B * D,            # sub + abs + ones-matvec accumulate
            transcendentals=0,
            bytes_accessed=bytes_accessed,
        ),
    )(g_gt, g)

    return out[0]  # (B,), matching torch.mean(..., dim=1) for 2-D inputs


if __name__ == "__main__":
    key = jax.random.PRNGKey(0)
    k1, k2 = jax.random.split(key)

    # Small shapes consistent with the module: batch=8, hidden=256.
    B, D = 8, 256
    g_gt = jax.random.normal(k1, (B, D), dtype=jnp.float32)
    g = jax.random.normal(k2, (B, D), dtype=jnp.float32)

    # f32 path (single block, grid (1, 1)).
    loss = jax.block_until_ready(l1_loss(g_gt, g, train_batchsize=B))
    ref = jnp.mean(jnp.abs(g_gt - g), axis=1)
    assert loss.shape == (B,)
    assert jnp.allclose(loss, ref, atol=1e-5, rtol=1e-5), (loss, ref)

    # bf16 path: native-dtype DMA + bf16 VALU/MXU, f32 accumulation.
    gt_bf16 = g_gt.astype(jnp.bfloat16)
    g_bf16 = g.astype(jnp.bfloat16)
    loss_bf16 = jax.block_until_ready(l1_loss(gt_bf16, g_bf16, train_batchsize=B))
    ref_bf16 = jnp.mean(jnp.abs(gt_bf16 - g_bf16).astype(jnp.float32), axis=1)
    assert loss_bf16.dtype == jnp.bfloat16
    assert jnp.allclose(
        loss_bf16.astype(jnp.float32), ref_bf16, atol=2e-2, rtol=2e-2
    ), (loss_bf16, ref_bf16)

    # Batch-tiled path (multiple "parallel" grid steps, partial last tile,
    # lane-dense partial output store).
    B2, D2 = 640, 512
    a2 = jax.random.normal(k1, (B2, D2), dtype=jnp.float32)
    b2 = jax.random.normal(k2, (B2, D2), dtype=jnp.float32)
    loss2 = jax.block_until_ready(l1_loss(a2, b2, train_batchsize=B2))
    ref2 = jnp.mean(jnp.abs(a2 - b2), axis=1)
    assert jnp.allclose(loss2, ref2, atol=1e-5, rtol=1e-5)

    # Feature-chunked fallback path (forced via a tiny block budget): exercises
    # the f32 accumulator, pl.when init/finalize and ragged-chunk masking.
    B3, D3 = 8, 4100
    a3 = jax.random.normal(k1, (B3, D3), dtype=jnp.float32)
    b3 = jax.random.normal(k2, (B3, D3), dtype=jnp.float32)
    loss3 = jax.block_until_ready(
        l1_loss(a3, b3, train_batchsize=B3, block_budget_bytes=16 * 1024)
    )
    ref3 = jnp.mean(jnp.abs(a3 - b3), axis=1)
    assert jnp.allclose(loss3, ref3, atol=1e-5, rtol=1e-5)

    print("KERNEL_OK")
</pallas_src>

<mosaic_0001>
module attributes {stable_mosaic.version = 11 : i64} {
  func.func @_l1_loss_kernel(%arg0: i32, %arg1: i32, %arg2: memref<8x256xf32, #tpu.memory_space<vmem>>, %arg3: memref<8x256xf32, #tpu.memory_space<vmem>>, %arg4: memref<1x8xf32, #tpu.memory_space<vmem>>, %arg5: memref<8x8xf32, #tpu.memory_space<vmem>>) attributes {dimension_semantics = [#tpu.dimension_semantics<parallel>, #tpu.dimension_semantics<arbitrary>], iteration_bounds = array<i64: 1, 1>, scalar_prefetch = 0 : i64, scratch_operands = 1 : i64, tpu.core_type = #tpu.core_type<tc>, window_params = [{transform_indices = @transform_0, window_bounds = array<i64: 8, 256>}, {transform_indices = @transform_1, window_bounds = array<i64: 8, 256>}, {transform_indices = @transform_2, window_bounds = array<i64: 1, 8>}]} {
    %c0_i32 = arith.constant 0 : i32
    %0 = arith.cmpi eq, %arg1, %c0_i32 : i32
    %1 = arith.extui %0 : i1 to i32
    %c0_i32_0 = arith.constant 0 : i32
    %2 = arith.cmpi ne, %1, %c0_i32_0 : i32
    scf.if %2 {
      %cst_11 = arith.constant 0.000000e+00 : f32
      %15 = vector.broadcast %cst_11 : f32 to vector<8x8xf32>
      %c0_12 = arith.constant 0 : index
      %c0_13 = arith.constant 0 : index
      %16 = vector.load %arg5[%c0_12, %c0_13] : memref<8x8xf32, #tpu.memory_space<vmem>>, vector<8x8xf32>
      tpu.vector_store %arg5[%c0_12, %c0_13], %15 {strides = array<i32>} : memref<8x8xf32, #tpu.memory_space<vmem>>, vector<8x8xf32>,
    } else {
    }
    %c0 = arith.constant 0 : index
    %c0_1 = arith.constant 0 : index
    %3 = vector.load %arg2[%c0, %c0_1] : memref<8x256xf32, #tpu.memory_space<vmem>>, vector<8x256xf32>
    %c0_2 = arith.constant 0 : index
    %c0_3 = arith.constant 0 : index
    %4 = vector.load %arg3[%c0_2, %c0_3] : memref<8x256xf32, #tpu.memory_space<vmem>>, vector<8x256xf32>
    %5 = arith.subf %3, %4 : vector<8x256xf32>
    %6 = math.absf %5 : vector<8x256xf32>
    %cst = arith.constant 1.000000e+00 : f32
    %7 = vector.broadcast %cst : f32 to vector<8x256xf32>
    %cst_4 = arith.constant dense<0.000000e+00> : vector<8x8xf32>
    %8 = tpu.matmul %7, %6, %cst_4 {dimension_numbers = #tpu.dot_dimension_numbers<[1], [1], [0], [0], [0, 0, 1, 0], [], []>, precision = #tpu.contract_precision<fp32>} : vector<8x256xf32>, vector<8x256xf32>, vector<8x8xf32> -> vector<8x8xf32>
    %c0_5 = arith.constant 0 : index
    %c0_6 = arith.constant 0 : index
    %9 = vector.load %arg5[%c0_5, %c0_6] : memref<8x8xf32, #tpu.memory_space<vmem>>, vector<8x8xf32>
    %10 = arith.addf %9, %8 : vector<8x8xf32>
    %c0_7 = arith.constant 0 : index
    %c0_8 = arith.constant 0 : index
    %11 = vector.load %arg5[%c0_7, %c0_8] : memref<8x8xf32, #tpu.memory_space<vmem>>, vector<8x8xf32>
    tpu.vector_store %arg5[%c0_7, %c0_8], %10 {strides = array<i32>} : memref<8x8xf32, #tpu.memory_space<vmem>>, vector<8x8xf32>,
    %c0_i32_9 = arith.constant 0 : i32
    %12 = arith.cmpi eq, %arg1, %c0_i32_9 : i32
    %13 = arith.extui %12 : i1 to i32
    %c0_i32_10 = arith.constant 0 : i32
    %14 = arith.cmpi ne, %13, %c0_i32_10 : i32
    scf.if %14 {
      %c0_11 = arith.constant 0 : index
      %c0_12 = arith.constant 0 : index
      %15 = vector.load %arg5[%c0_11, %c0_12] : memref<8x8xf32, #tpu.memory_space<vmem>>, vector<1x8xf32>
      %cst_13 = arith.constant 3.906250e-03 : f32
      %16 = vector.broadcast %cst_13 : f32 to vector<1x8xf32>
      %17 = arith.mulf %15, %16 : vector<1x8xf32>
      %c0_14 = arith.constant 0 : index
      %c0_15 = arith.constant 0 : index
      %18 = vector.load %arg4[%c0_14, %c0_15] : memref<1x8xf32, #tpu.memory_space<vmem>>, vector<1x8xf32>
      tpu.vector_store %arg4[%c0_14, %c0_15], %17 {strides = array<i32>} : memref<1x8xf32, #tpu.memory_space<vmem>>, vector<1x8xf32>,
    } else {
    }
    return
  }
  func.func @transform_0(%arg0: i32, %arg1: i32) -> (i32, i32) {
    %c0_i32 = arith.constant 0 : i32
    return %arg0, %arg1 : i32, i32
  }
  func.func @transform_1(%arg0: i32, %arg1: i32) -> (i32, i32) {
    %c0_i32 = arith.constant 0 : i32
    return %arg0, %arg1 : i32, i32
  }
  func.func @transform_2(%arg0: i32, %arg1: i32) -> (i32, i32) {
    %c0_i32 = arith.constant 0 : i32
    %c0_i32_0 = arith.constant 0 : i32
    return %c0_i32, %arg0 : i32, i32
  }
}

</mosaic_0001>

<llo_original>
// kernel: tpu_custom_call.1
$region0: #{tpu_custom_call.1}
  #allocation0 [shape = 'u32[]', space=smem, size = 0x4, offset = 0x4, fixed_abs, tag = 'smem constant byte address 0x4 - core index']
  #allocation1 [shape = 'u32[144,128]{1,0:T(1,128)}', space=vmem, size = 0x12000, scoped, tag = 'internal scratch']
  #allocation2 [shape = 'f32[8,8]{1,0:T(8,128)}', space=vmem, size = 0x1000, scoped, tag = 'scratch operand']
  %s0 = inlined_call_operand.hbm [shape: f32[8,256], index: 0, kind: input, shape index: {}]
  %s1 = inlined_call_operand.hbm [shape: f32[8,256], index: 1, kind: input, shape index: {}]
  %s2 = inlined_call_operand.hbm [shape: f32[1,8], index: 2, kind: output, shape index: {}]
  %s3 = sld [smem:[#allocation0]]
  $region34: #{tpu_custom_call.1} parent=0
    _
  %s5 = ssub.s32 1, %s3
  %s6 = scalar_select 0, %s5, %s3
  $region1: #{tpu_custom_call.1} parent=0
    #allocation3 [shape = 'u8[8192]{0}', space=vmem, size = 0x2000, scoped, tag = 'input window, operand 0, single buffered']
    #allocation4 [shape = 's32[1]{0}', space=sflag, size = 0x4, scoped, tag = 'scoped memory for tpu_custom_call.1']
    #allocation5 [shape = 's32[1]{0}', space=sflag, size = 0x4, scoped, tag = 'scoped memory for tpu_custom_call.1']
    #allocation6 [shape = 'u8[8192]{0}', space=vmem, size = 0x2000, scoped, tag = 'input window, operand 1, single buffered']
    #allocation7 [shape = 's32[1]{0}', space=sflag, size = 0x4, scoped, tag = 'scoped memory for tpu_custom_call.1']
    #allocation8 [shape = 'u8[512]{0}', space=vmem, size = 0x400, scoped, tag = 'output window, operand 0, single buffered']
    %7 = vsyncpa [#allocation4], 0
    %8 = vsyncpa [#allocation7], 0
    %9 = vsyncpa [#allocation5], 0
    // Predicated region
    $region2: #{tpu_custom_call.1} parent=1 // pred_check
      _
    $region3: #{tpu_custom_call.1} parent=1 // pred_check_branch
      %11 = sbr.rel (0) target = $region5
    $region4: #{tpu_custom_call.1} parent=1 // pred_region
      %s13 = ssub.s32 256, 256
      %14 = vsyncadd [#allocation4], %s13
      %s16 = sshll.u32 [#allocation3], 4
      %s17 = int_to_ptr.vmem [resolvable:$true] %s16
      %19 = dma.hbm_to_vmem [thread:$0]  %s0, 256, %s17, [#allocation4]
    $region5: #{tpu_custom_call.1} parent=1 // pred_fallthru
      _
    // Predicated region
    $region6: #{tpu_custom_call.1} parent=1 // pred_check
      _
    $region7: #{tpu_custom_call.1} parent=1 // pred_check_branch
      %21 = sbr.rel (0) target = $region9
    $region8: #{tpu_custom_call.1} parent=1 // pred_region
      %s23 = ssub.s32 256, 256
      %24 = vsyncadd [#allocation7], %s23
      %s26 = sshll.u32 [#allocation6], 4
      %s27 = int_to_ptr.vmem [resolvable:$true] %s26
      %29 = dma.hbm_to_vmem [thread:$0]  %s1, 256, %s27, [#allocation7]
    $region9: #{tpu_custom_call.1} parent=1 // pred_fallthru
      _
    // Predicated region
    $region10: #{tpu_custom_call.1} parent=1 // pred_check
      _
    $region11: #{tpu_custom_call.1} parent=1 // pred_check_branch
      %31 = sbr.rel (0) target = $region13
    $region12: #{tpu_custom_call.1} parent=1 // pred_region
      %32 = dma.done [#allocation4], 256
    $region13: #{tpu_custom_call.1} parent=1 // pred_fallthru
      _
    // Predicated region
    $region14: #{tpu_custom_call.1} parent=1 // pred_check
      _
    $region15: #{tpu_custom_call.1} parent=1 // pred_check_branch
      %34 = sbr.rel (0) target = $region17
    $region16: #{tpu_custom_call.1} parent=1 // pred_region
      %35 = dma.done [#allocation7], 256
    $region17: #{tpu_custom_call.1} parent=1 // pred_fallthru
      _
    %p36 = scmp.eq.s32.totalorder 0, 0
    // Predicated region
    $region18: #{tpu_custom_call.1} parent=1 // pred_check
      %p37 = pneg %p36
    $region19: #{tpu_custom_call.1} parent=1 // pred_check_branch
      %39 = sbr.rel (%p37) target = $region21
    $region20: #{tpu_custom_call.1} parent=1 // pred_region
      %vm40 = vcmask 64512
      %41 = vst.msk [vmem:[#allocation2] sm:$0xff] %vm40, 0.0
    $region21: #{tpu_custom_call.1} parent=1 // pred_fallthru
      _
    %v42 = vld [vmem:[#allocation3] sm:$0xff]
    %v43 = vld [vmem:[#allocation3 + $0x8] sm:$0xff]
    %v44 = vld [vmem:[#allocation6] sm:$0xff]
    %v45 = vld [vmem:[#allocation6 + $0x8] sm:$0xff]
    %v46 = vsub.f32 %v42, %v44
    %v47 = vsub.f32 %v43, %v45
    %v48 = vand.u32 2147483647, %v46
    %v49 = vand.u32 2147483647, %v47
    %50 = vmatprep.subr.mxu0 0.0
    %51 = vmatpush1.xpose.msra.mxu0 0.0
    %52 = vmatprep.subr.mxu0 0.0
    %53 = vmatpush1.xpose.msra.mxu0 0.0
    %54 = vmatprep.subr.mxu0 0.0
    %55 = vmatpush1.xpose.msra.mxu0 0.0
    %56 = vmatprep.subr.mxu0 0.0
    %57 = vmatpush1.xpose.msra.mxu0 0.0
    %58 = vmatprep.subr.mxu0 0.0
    %59 = vmatpush1.xpose.msra.mxu0 0.0
    %60 = vmatprep.subr.mxu0 0.0
    %61 = vmatpush1.xpose.msra.mxu0 0.0
    %62 = vmatprep.subr.mxu0 0.0
    %63 = vmatpush1.xpose.msra.mxu0 0.0
    %64 = vmatprep.subr.mxu0 0.0
    %65 = vmatpush1.xpose.msra.mxu0 0.0
    %66 = vmatprep.subr.mxu0 0.0
    %67 = vmatpush1.xpose.msra.mxu0 0.0
    %68 = vmatprep.subr.mxu0 0.0
    %69 = vmatpush1.xpose.msra.mxu0 0.0
    %70 = vmatprep.subr.mxu0 0.0
    %71 = vmatpush1.xpose.msra.mxu0 0.0
    %72 = vmatprep.subr.mxu0 0.0
    %73 = vmatpush1.xpose.msra.mxu0 0.0
    %74 = vmatprep.subr.mxu0 0.0
    %75 = vmatpush1.xpose.msra.mxu0 0.0
    %76 = vmatprep.subr.mxu0 0.0
    %77 = vmatpush1.xpose.msra.mxu0 0.0
    %78 = vmatprep.subr.mxu0 0.0
    %79 = vmatpush1.xpose.msra.mxu0 0.0
    %v80 = vand.u32 %v49, 4294901760
    %81 = vmatprep.subr.mxu0 %v80
    %v82 = vand.u32 %v48, 4294901760
    %83 = vmatpush1.xpose.msra.mxu0 %v82
    %84 = vmatprep.subr.mxu0 0.0
    %85 = vmatpush2.xpose.msra.mxu0 0.0
    %86 = vmatprep.subr.mxu0 0.0
    %87 = vmatpush2.xpose.msra.mxu0 0.0
    %88 = vmatprep.subr.mxu0 0.0
    %89 = vmatpush2.xpose.msra.mxu0 0.0
    %90 = vmatprep.subr.mxu0 0.0
    %91 = vmatpush2.xpose.msra.mxu0 0.0
    %92 = vmatprep.subr.mxu0 0.0
    %93 = vmatpush2.xpose.msra.mxu0 0.0
    %94 = vmatprep.subr.mxu0 0.0
    %95 = vmatpush2.xpose.msra.mxu0 0.0
    %96 = vmatprep.subr.mxu0 0.0
    %97 = vmatpush2.xpose.msra.mxu0 0.0
    %98 = vmatprep.subr.mxu0 0.0
    %99 = vmatpush2.xpose.msra.mxu0 0.0
    %100 = vmatprep.subr.mxu0 0.0
    %101 = vmatpush2.xpose.msra.mxu0 0.0
    %102 = vmatprep.subr.mxu0 0.0
    %103 = vmatpush2.xpose.msra.mxu0 0.0
    %104 = vmatprep.subr.mxu0 0.0
    %105 = vmatpush2.xpose.msra.mxu0 0.0
    %106 = vmatprep.subr.mxu0 0.0
    %107 = vmatpush2.xpose.msra.mxu0 0.0
    %108 = vmatprep.subr.mxu0 0.0
    %109 = vmatpush2.xpose.msra.mxu0 0.0
    %110 = vmatprep.subr.mxu0 0.0
    %111 = vmatpush2.xpose.msra.mxu0 0.0
    %112 = vmatprep.subr.mxu0 0.0
    %113 = vmatpush2.xpose.msra.mxu0 0.0
    %114 = vmatprep.subr.mxu0 0.0
    %115 = vmatpush2.xpose.msra.mxu0 0.0
    %116 = vmatprep.mubr.f32.mxu0 0.0
    %117 = vmatmul.mubr.f32.gmra.mxu0 0.0
    %v118 = vpop.f32.mrf.mxu0
    %v119 = vadd.f32 0.0, %v118
    %v120 = vpop.f32.mrf.mxu0
    %121 = vdwg.mxu0
    %122 = vmatprep.subr.mxu0 0.0
    %123 = vmatpush1.xpose.msra.mxu0 0.0
    %124 = vmatprep.subr.mxu0 0.0
    %125 = vmatpush1.xpose.msra.mxu0 0.0
    %126 = vmatprep.subr.mxu0 0.0
    %127 = vmatpush1.xpose.msra.mxu0 0.0
    %128 = vmatprep.subr.mxu0 0.0
    %129 = vmatpush1.xpose.msra.mxu0 0.0
    %130 = vmatprep.subr.mxu0 0.0
    %131 = vmatpush1.xpose.msra.mxu0 0.0
    %132 = vmatprep.subr.mxu0 0.0
    %133 = vmatpush1.xpose.msra.mxu0 0.0
    %134 = vmatprep.subr.mxu0 0.0
    %135 = vmatpush1.xpose.msra.mxu0 0.0
    %136 = vmatprep.subr.mxu0 0.0
    %137 = vmatpush1.xpose.msra.mxu0 0.0
    %138 = vmatprep.subr.mxu0 0.0
    %139 = vmatpush1.xpose.msra.mxu0 0.0
    %140 = vmatprep.subr.mxu0 0.0
    %141 = vmatpush1.xpose.msra.mxu0 0.0
    %142 = vmatprep.subr.mxu0 0.0
    %143 = vmatpush1.xpose.msra.mxu0 0.0
    %144 = vmatprep.subr.mxu0 0.0
    %145 = vmatpush1.xpose.msra.mxu0 0.0
    %146 = vmatprep.subr.mxu0 0.0
    %147 = vmatpush1.xpose.msra.mxu0 0.0
    %148 = vmatprep.subr.mxu0 0.0
    %149 = vmatpush1.xpose.msra.mxu0 0.0
    %150 = vmatprep.subr.mxu0 0.0
    %151 = vmatpush1.xpose.msra.mxu0 0.0
    %v152 = vand.u32 %v49, 4294901760
    %v153 = vsub.f32 %v49, %v152
    %v154 = vand.u32 %v153, 4294901760
    %v155 = vsub.f32 %v153, %v154
    %v156 = vand.u32 %v155, 4294901760
    %157 = vmatprep.subr.mxu0 %v156
    %v158 = vand.u32 %v48, 4294901760
    %v159 = vsub.f32 %v48, %v158
    %v160 = vand.u32 %v159, 4294901760
    %v161 = vsub.f32 %v159, %v160
    %v162 = vand.u32 %v161, 4294901760
    %163 = vmatpush1.xpose.msra.mxu0 %v162
    %164 = vmatprep.subr.mxu0 0.0
    %165 = vmatpush2.xpose.msra.mxu0 0.0
    %166 = vmatprep.subr.mxu0 0.0
    %167 = vmatpush2.xpose.msra.mxu0 0.0
    %168 = vmatprep.subr.mxu0 0.0
    %169 = vmatpush2.xpose.msra.mxu0 0.0
    %170 = vmatprep.subr.mxu0 0.0
    %171 = vmatpush2.xpose.msra.mxu0 0.0
    %172 = vmatprep.subr.mxu0 0.0
    %173 = vmatpush2.xpose.msra.mxu0 0.0
    %174 = vmatprep.subr.mxu0 0.0
    %175 = vmatpush2.xpose.msra.mxu0 0.0
    %176 = vmatprep.subr.mxu0 0.0
    %177 = vmatpush2.xpose.msra.mxu0 0.0
    %178 = vmatprep.subr.mxu0 0.0
    %179 = vmatpush2.xpose.msra.mxu0 0.0
    %180 = vmatprep.subr.mxu0 0.0
    %181 = vmatpush2.xpose.msra.mxu0 0.0
    %182 = vmatprep.subr.mxu0 0.0
    %183 = vmatpush2.xpose.msra.mxu0 0.0
    %184 = vmatprep.subr.mxu0 0.0
    %185 = vmatpush2.xpose.msra.mxu0 0.0
    %186 = vmatprep.subr.mxu0 0.0
    %187 = vmatpush2.xpose.msra.mxu0 0.0
    %188 = vmatprep.subr.mxu0 0.0
    %189 = vmatpush2.xpose.msra.mxu0 0.0
    %190 = vmatprep.subr.mxu0 0.0
    %191 = vmatpush2.xpose.msra.mxu0 0.0
    %192 = vmatprep.subr.mxu0 0.0
    %193 = vmatpush2.xpose.msra.mxu0 0.0
    %194 = vmatprep.subr.mxu0 0.0
    %195 = vmatpush2.xpose.msra.mxu0 0.0
    %196 = vmatprep.mubr.f32.mxu0 1.0
    %197 = vmatmul.mubr.f32.gmra.mxu0 1.0
    %v198 = vpop.f32.mrf.mxu0
    %v199 = vadd.f32 %v119, %v198
    %v200 = vpop.f32.mrf.mxu0
    %201 = vdwg.mxu0
    %202 = vmatprep.subr.mxu0 0.0
    %203 = vmatpush1.xpose.msra.mxu0 0.0
    %204 = vmatprep.subr.mxu0 0.0
    %205 = vmatpush1.xpose.msra.mxu0 0.0
    %206 = vmatprep.subr.mxu0 0.0
    %207 = vmatpush1.xpose.msra.mxu0 0.0
    %208 = vmatprep.subr.mxu0 0.0
    %209 = vmatpush1.xpose.msra.mxu0 0.0
    %210 = vmatprep.subr.mxu0 0.0
    %211 = vmatpush1.xpose.msra.mxu0 0.0
    %212 = vmatprep.subr.mxu0 0.0
    %213 = vmatpush1.xpose.msra.mxu0 0.0
    %214 = vmatprep.subr.mxu0 0.0
    %215 = vmatpush1.xpose.msra.mxu0 0.0
    %216 = vmatprep.subr.mxu0 0.0
    %217 = vmatpush1.xpose.msra.mxu0 0.0
    %218 = vmatprep.subr.mxu0 0.0
    %219 = vmatpush1.xpose.msra.mxu0 0.0
    %220 = vmatprep.subr.mxu0 0.0
    %221 = vmatpush1.xpose.msra.mxu0 0.0
    %222 = vmatprep.subr.mxu0 0.0
    %223 = vmatpush1.xpose.msra.mxu0 0.0
    %224 = vmatprep.subr.mxu0 0.0
    %225 = vmatpush1.xpose.msra.mxu0 0.0
    %226 = vmatprep.subr.mxu0 0.0
    %227 = vmatpush1.xpose.msra.mxu0 0.0
    %228 = vmatprep.subr.mxu0 0.0
    %229 = vmatpush1.xpose.msra.mxu0 0.0
    %230 = vmatprep.subr.mxu0 0.0
    %231 = vmatpush1.xpose.msra.mxu0 0.0
    %v232 = vand.u32 %v49, 4294901760
    %v233 = vsub.f32 %v49, %v232
    %234 = vmatprep.subr.mxu0 %v233
    %v235 = vand.u32 %v48, 4294901760
    %v236 = vsub.f32 %v48, %v235
    %237 = vmatpush1.xpose.msra.mxu0 %v236
    %238 = vmatprep.subr.mxu0 0.0
    %239 = vmatpush2.xpose.msra.mxu0 0.0
    %240 = vmatprep.subr.mxu0 0.0
    %241 = vmatpush2.xpose.msra.mxu0 0.0
    %242 = vmatprep.subr.mxu0 0.0
    %243 = vmatpush2.xpose.msra.mxu0 0.0
    %244 = vmatprep.subr.mxu0 0.0
    %245 = vmatpush2.xpose.msra.mxu0 0.0
    %246 = vmatprep.subr.mxu0 0.0
    %247 = vmatpush2.xpose.msra.mxu0 0.0
    %248 = vmatprep.subr.mxu0 0.0
    %249 = vmatpush2.xpose.msra.mxu0 0.0
    %250 = vmatprep.subr.mxu0 0.0
    %251 = vmatpush2.xpose.msra.mxu0 0.0
    %252 = vmatprep.subr.mxu0 0.0
    %253 = vmatpush2.xpose.msra.mxu0 0.0
    %254 = vmatprep.subr.mxu0 0.0
    %255 = vmatpush2.xpose.msra.mxu0 0.0
    %256 = vmatprep.subr.mxu0 0.0
    %257 = vmatpush2.xpose.msra.mxu0 0.0
    %258 = vmatprep.subr.mxu0 0.0
    %259 = vmatpush2.xpose.msra.mxu0 0.0
    %260 = vmatprep.subr.mxu0 0.0
    %261 = vmatpush2.xpose.msra.mxu0 0.0
    %262 = vmatprep.subr.mxu0 0.0
    %263 = vmatpush2.xpose.msra.mxu0 0.0
    %264 = vmatprep.subr.mxu0 0.0
    %265 = vmatpush2.xpose.msra.mxu0 0.0
    %266 = vmatprep.subr.mxu0 0.0
    %267 = vmatpush2.xpose.msra.mxu0 0.0
    %268 = vmatprep.subr.mxu0 0.0
    %269 = vmatpush2.xpose.msra.mxu0 0.0
    %270 = vmatprep.mubr.f32.mxu0 0.0
    %271 = vmatmul.mubr.f32.gmra.mxu0 0.0
    %v272 = vpop.f32.mrf.mxu0
    %v273 = vadd.f32 %v199, %v272
    %v274 = vpop.f32.mrf.mxu0
    %275 = vdwg.mxu0
    %276 = vmatprep.subr.mxu0 0.0
    %277 = vmatpush1.xpose.msra.mxu0 0.0
    %278 = vmatprep.subr.mxu0 0.0
    %279 = vmatpush1.xpose.msra.mxu0 0.0
    %280 = vmatprep.subr.mxu0 0.0
    %281 = vmatpush1.xpose.msra.mxu0 0.0
    %282 = vmatprep.subr.mxu0 0.0
    %283 = vmatpush1.xpose.msra.mxu0 0.0
    %284 = vmatprep.subr.mxu0 0.0
    %285 = vmatpush1.xpose.msra.mxu0 0.0
    %286 = vmatprep.subr.mxu0 0.0
    %287 = vmatpush1.xpose.msra.mxu0 0.0
    %288 = vmatprep.subr.mxu0 0.0
    %289 = vmatpush1.xpose.msra.mxu0 0.0
    %290 = vmatprep.subr.mxu0 0.0
    %291 = vmatpush1.xpose.msra.mxu0 0.0
    %292 = vmatprep.subr.mxu0 0.0
    %293 = vmatpush1.xpose.msra.mxu0 0.0
    %294 = vmatprep.subr.mxu0 0.0
    %295 = vmatpush1.xpose.msra.mxu0 0.0
    %296 = vmatprep.subr.mxu0 0.0
    %297 = vmatpush1.xpose.msra.mxu0 0.0
    %298 = vmatprep.subr.mxu0 0.0
    %299 = vmatpush1.xpose.msra.mxu0 0.0
    %300 = vmatprep.subr.mxu0 0.0
    %301 = vmatpush1.xpose.msra.mxu0 0.0
    %302 = vmatprep.subr.mxu0 0.0
    %303 = vmatpush1.xpose.msra.mxu0 0.0
    %304 = vmatprep.subr.mxu0 0.0
    %305 = vmatpush1.xpose.msra.mxu0 0.0
    %v306 = vand.u32 %v49, 4294901760
    %307 = vmatprep.subr.mxu0 %v306
    %v308 = vand.u32 %v48, 4294901760
    %309 = vmatpush1.xpose.msra.mxu0 %v308
    %310 = vmatprep.subr.mxu0 0.0
    %311 = vmatpush2.xpose.msra.mxu0 0.0
    %312 = vmatprep.subr.mxu0 0.0
    %313 = vmatpush2.xpose.msra.mxu0 0.0
    %314 = vmatprep.subr.mxu0 0.0
    %315 = vmatpush2.xpose.msra.mxu0 0.0
    %316 = vmatprep.subr.mxu0 0.0
    %317 = vmatpush2.xpose.msra.mxu0 0.0
    %318 = vmatprep.subr.mxu0 0.0
    %319 = vmatpush2.xpose.msra.mxu0 0.0
    %320 = vmatprep.subr.mxu0 0.0
    %321 = vmatpush2.xpose.msra.mxu0 0.0
    %322 = vmatprep.subr.mxu0 0.0
    %323 = vmatpush2.xpose.msra.mxu0 0.0
    %324 = vmatprep.subr.mxu0 0.0
    %325 = vmatpush2.xpose.msra.mxu0 0.0
    %326 = vmatprep.subr.mxu0 0.0
    %327 = vmatpush2.xpose.msra.mxu0 0.0
    %328 = vmatprep.subr.mxu0 0.0
    %329 = vmatpush2.xpose.msra.mxu0 0.0
    %330 = vmatprep.subr.mxu0 0.0
    %331 = vmatpush2.xpose.msra.mxu0 0.0
    %332 = vmatprep.subr.mxu0 0.0
    %333 = vmatpush2.xpose.msra.mxu0 0.0
    %334 = vmatprep.subr.mxu0 0.0
    %335 = vmatpush2.xpose.msra.mxu0 0.0
    %336 = vmatprep.subr.mxu0 0.0
    %337 = vmatpush2.xpose.msra.mxu0 0.0
    %338 = vmatprep.subr.mxu0 0.0
    %339 = vmatpush2.xpose.msra.mxu0 0.0
    %340 = vmatprep.subr.mxu0 0.0
    %341 = vmatpush2.xpose.msra.mxu0 0.0
    %342 = vmatprep.mubr.f32.mxu0 0.0
    %343 = vmatmul.mubr.f32.gmra.mxu0 0.0
    %v344 = vpop.f32.mrf.mxu0
    %v345 = vadd.f32 %v273, %v344
    %v346 = vpop.f32.mrf.mxu0
    %347 = vdwg.mxu0
    %348 = vmatprep.subr.mxu0 0.0
    %349 = vmatpush1.xpose.msra.mxu0 0.0
    %350 = vmatprep.subr.mxu0 0.0
    %351 = vmatpush1.xpose.msra.mxu0 0.0
    %352 = vmatprep.subr.mxu0 0.0
    %353 = vmatpush1.xpose.msra.mxu0 0.0
    %354 = vmatprep.subr.mxu0 0.0
    %355 = vmatpush1.xpose.msra.mxu0 0.0
    %356 = vmatprep.subr.mxu0 0.0
    %357 = vmatpush1.xpose.msra.mxu0 0.0
    %358 = vmatprep.subr.mxu0 0.0
    %359 = vmatpush1.xpose.msra.mxu0 0.0
    %360 = vmatprep.subr.mxu0 0.0
    %361 = vmatpush1.xpose.msra.mxu0 0.0
    %362 = vmatprep.subr.mxu0 0.0
    %363 = vmatpush1.xpose.msra.mxu0 0.0
    %364 = vmatprep.subr.mxu0 0.0
    %365 = vmatpush1.xpose.msra.mxu0 0.0
    %366 = vmatprep.subr.mxu0 0.0
    %367 = vmatpush1.xpose.msra.mxu0 0.0
    %368 = vmatprep.subr.mxu0 0.0
    %369 = vmatpush1.xpose.msra.mxu0 0.0
    %370 = vmatprep.subr.mxu0 0.0
    %371 = vmatpush1.xpose.msra.mxu0 0.0
    %372 = vmatprep.subr.mxu0 0.0
    %373 = vmatpush1.xpose.msra.mxu0 0.0
    %374 = vmatprep.subr.mxu0 0.0
    %375 = vmatpush1.xpose.msra.mxu0 0.0
    %376 = vmatprep.subr.mxu0 0.0
    %377 = vmatpush1.xpose.msra.mxu0 0.0
    %v378 = vand.u32 %v49, 4294901760
    %v379 = vsub.f32 %v49, %v378
    %v380 = vand.u32 %v379, 4294901760
    %381 = vmatprep.subr.mxu0 %v380
    %v382 = vand.u32 %v48, 4294901760
    %v383 = vsub.f32 %v48, %v382
    %v384 = vand.u32 %v383, 4294901760
    %385 = vmatpush1.xpose.msra.mxu0 %v384
    %386 = vmatprep.subr.mxu0 0.0
    %387 = vmatpush2.xpose.msra.mxu0 0.0
    %388 = vmatprep.subr.mxu0 0.0
    %389 = vmatpush2.xpose.msra.mxu0 0.0
    %390 = vmatprep.subr.mxu0 0.0
    %391 = vmatpush2.xpose.msra.mxu0 0.0
    %392 = vmatprep.subr.mxu0 0.0
    %393 = vmatpush2.xpose.msra.mxu0 0.0
    %394 = vmatprep.subr.mxu0 0.0
    %395 = vmatpush2.xpose.msra.mxu0 0.0
    %396 = vmatprep.subr.mxu0 0.0
    %397 = vmatpush2.xpose.msra.mxu0 0.0
    %398 = vmatprep.subr.mxu0 0.0
    %399 = vmatpush2.xpose.msra.mxu0 0.0
    %400 = vmatprep.subr.mxu0 0.0
    %401 = vmatpush2.xpose.msra.mxu0 0.0
    %402 = vmatprep.subr.mxu0 0.0
    %403 = vmatpush2.xpose.msra.mxu0 0.0
    %404 = vmatprep.subr.mxu0 0.0
    %405 = vmatpush2.xpose.msra.mxu0 0.0
    %406 = vmatprep.subr.mxu0 0.0
    %407 = vmatpush2.xpose.msra.mxu0 0.0
    %408 = vmatprep.subr.mxu0 0.0
    %409 = vmatpush2.xpose.msra.mxu0 0.0
    %410 = vmatprep.subr.mxu0 0.0
    %411 = vmatpush2.xpose.msra.mxu0 0.0
    %412 = vmatprep.subr.mxu0 0.0
    %413 = vmatpush2.xpose.msra.mxu0 0.0
    %414 = vmatprep.subr.mxu0 0.0
    %415 = vmatpush2.xpose.msra.mxu0 0.0
    %416 = vmatprep.subr.mxu0 0.0
    %417 = vmatpush2.xpose.msra.mxu0 0.0
    %418 = vmatprep.mubr.f32.mxu0 1.0
    %419 = vmatmul.mubr.f32.gmra.mxu0 1.0
    %v420 = vpop.f32.mrf.mxu0
    %v421 = vadd.f32 %v345, %v420
    %v422 = vpop.f32.mrf.mxu0
    %423 = vdwg.mxu0
    %424 = vmatprep.subr.mxu0 0.0
    %425 = vmatpush1.xpose.msra.mxu0 0.0
    %426 = vmatprep.subr.mxu0 0.0
    %427 = vmatpush1.xpose.msra.mxu0 0.0
    %428 = vmatprep.subr.mxu0 0.0
    %429 = vmatpush1.xpose.msra.mxu0 0.0
    %430 = vmatprep.subr.mxu0 0.0
    %431 = vmatpush1.xpose.msra.mxu0 0.0
    %432 = vmatprep.subr.mxu0 0.0
    %433 = vmatpush1.xpose.msra.mxu0 0.0
    %434 = vmatprep.subr.mxu0 0.0
    %435 = vmatpush1.xpose.msra.mxu0 0.0
    %436 = vmatprep.subr.mxu0 0.0
    %437 = vmatpush1.xpose.msra.mxu0 0.0
    %438 = vmatprep.subr.mxu0 0.0
    %439 = vmatpush1.xpose.msra.mxu0 0.0
    %440 = vmatprep.subr.mxu0 0.0
    %441 = vmatpush1.xpose.msra.mxu0 0.0
    %442 = vmatprep.subr.mxu0 0.0
    %443 = vmatpush1.xpose.msra.mxu0 0.0
    %444 = vmatprep.subr.mxu0 0.0
    %445 = vmatpush1.xpose.msra.mxu0 0.0
    %446 = vmatprep.subr.mxu0 0.0
    %447 = vmatpush1.xpose.msra.mxu0 0.0
    %448 = vmatprep.subr.mxu0 0.0
    %449 = vmatpush1.xpose.msra.mxu0 0.0
    %450 = vmatprep.subr.mxu0 0.0
    %451 = vmatpush1.xpose.msra.mxu0 0.0
    %452 = vmatprep.subr.mxu0 0.0
    %453 = vmatpush1.xpose.msra.mxu0 0.0
    %v454 = vand.u32 %v49, 4294901760
    %455 = vmatprep.subr.mxu0 %v454
    %v456 = vand.u32 %v48, 4294901760
    %457 = vmatpush1.xpose.msra.mxu0 %v456
    %458 = vmatprep.subr.mxu0 0.0
    %459 = vmatpush2.xpose.msra.mxu0 0.0
    %460 = vmatprep.subr.mxu0 0.0
    %461 = vmatpush2.xpose.msra.mxu0 0.0
    %462 = vmatprep.subr.mxu0 0.0
    %463 = vmatpush2.xpose.msra.mxu0 0.0
    %464 = vmatprep.subr.mxu0 0.0
    %465 = vmatpush2.xpose.msra.mxu0 0.0
    %466 = vmatprep.subr.mxu0 0.0
    %467 = vmatpush2.xpose.msra.mxu0 0.0
    %468 = vmatprep.subr.mxu0 0.0
    %469 = vmatpush2.xpose.msra.mxu0 0.0
    %470 = vmatprep.subr.mxu0 0.0
    %471 = vmatpush2.xpose.msra.mxu0 0.0
    %472 = vmatprep.subr.mxu0 0.0
    %473 = vmatpush2.xpose.msra.mxu0 0.0
    %474 = vmatprep.subr.mxu0 0.0
    %475 = vmatpush2.xpose.msra.mxu0 0.0
    %476 = vmatprep.subr.mxu0 0.0
    %477 = vmatpush2.xpose.msra.mxu0 0.0
    %478 = vmatprep.subr.mxu0 0.0
    %479 = vmatpush2.xpose.msra.mxu0 0.0
    %480 = vmatprep.subr.mxu0 0.0
    %481 = vmatpush2.xpose.msra.mxu0 0.0
    %482 = vmatprep.subr.mxu0 0.0
    %483 = vmatpush2.xpose.msra.mxu0 0.0
    %484 = vmatprep.subr.mxu0 0.0
    %485 = vmatpush2.xpose.msra.mxu0 0.0
    %486 = vmatprep.subr.mxu0 0.0
    %487 = vmatpush2.xpose.msra.mxu0 0.0
    %488 = vmatprep.subr.mxu0 0.0
    %489 = vmatpush2.xpose.msra.mxu0 0.0
    %490 = vmatprep.mubr.f32.mxu0 1.0
    %491 = vmatmul.mubr.f32.gmra.mxu0 1.0
    %v492 = vpop.f32.mrf.mxu0
    %v493 = vadd.f32 %v421, %v492
    %v494 = vpop.f32.mrf.mxu0
    %495 = vdwg.mxu0
    %v496 = vld [vmem:[#allocation2] sm:$0xff]
    %v497 = vadd.f32 %v496, %v493
    %vm498 = vcmask 64512
    %499 = vst.msk [vmem:[#allocation2] sm:$0xff] %vm498, %v497
    // Predicated region
    $region22: #{tpu_custom_call.1} parent=1 // pred_check
      %p500 = pneg %p36
    $region23: #{tpu_custom_call.1} parent=1 // pred_check_branch
      %502 = sbr.rel (%p500) target = $region25
    $region24: #{tpu_custom_call.1} parent=1 // pred_region
      %v503 = vld [vmem:[#allocation2] sm:$0x1]
      %v504 = vmul.f32 %v503, 0.00390625
      %vm505 = vcmask 57344
      %506 = vst.msk [vmem:[#allocation8] sm:$0x1] %vm505, %v504
    $region25: #{tpu_custom_call.1} parent=1 // pred_fallthru
      _
    // Predicated region
    $region26: #{tpu_custom_call.1} parent=1 // pred_check
      _
    $region27: #{tpu_custom_call.1} parent=1 // pred_check_branch
      %508 = sbr.rel (0) target = $region29
    $region28: #{tpu_custom_call.1} parent=1 // pred_region
      %s510 = ssub.s32 16, 16
      %511 = vsyncadd [#allocation5], %s510
      %s513 = sshll.u32 [#allocation8], 4
      %s514 = int_to_ptr.vmem [resolvable:$true] %s513
      %516 = dma.vmem_to_hbm [thread:$0]  %s514, 16, %s2, [#allocation5]
    $region29: #{tpu_custom_call.1} parent=1 // pred_fallthru
      _
    // Predicated region
    $region30: #{tpu_custom_call.1} parent=1 // pred_check
      _
    $region31: #{tpu_custom_call.1} parent=1 // pred_check_branch
      %518 = sbr.rel (0) target = $region33
    $region32: #{tpu_custom_call.1} parent=1 // pred_region
      %519 = dma.done [#allocation5], 16
    $region33: #{tpu_custom_call.1} parent=1 // pred_fallthru
      _
    %520 = vsyncpa [#allocation4], 1
    %521 = vsyncpa [#allocation7], 1
    %522 = vsyncpa [#allocation5], 1

</llo_original>
